<compile_context>
chip_gen: v5e
topology: v5e:2x2
jax: 0.10.0
libtpu: 0.0.40
codegen_flags: <defaults>
</compile_context>

<pallas_src>
import jax
import jax.numpy as jnp
from jax import lax
from jax.experimental import pallas as pl
from jax.experimental.pallas import tpu as pltpu


def _round_up(x: int, m: int) -> int:
    return (x + m - 1) // m * m


_ONEHOT_MAX_V = 2048       # one-hot MXU gather only pays off for small vocabs
_HBM_GATHER_FACTOR = 8     # take the HBM-gather path when V >> 2*B
_HBM_NBUF = 8              # row-gather DMA depth (2 * 8 = 16 outstanding)


# ---------------------------------------------------------------------------
# Path "onehot": small-V one-hot gather on the MXU (no scalar prefetch).
def _w2v_onehot_kernel(cen_ref, ctx_ref, emb_ref, out_ref):
    # cen_ref/ctx_ref: (TB, 1) int32; emb_ref: (V_pad, E_pad); out_ref: (1, TB)
    tb = out_ref.shape[-1]
    v = emb_ref.shape[0]
    iota_v = lax.broadcasted_iota(jnp.int32, (tb, v), 1)
    onehot_c = (iota_v == cen_ref[...]).astype(emb_ref.dtype)       # (TB, V)
    onehot_x = (iota_v == ctx_ref[...]).astype(emb_ref.dtype)       # (TB, V)
    cen_rows = jnp.dot(onehot_c, emb_ref[...],
                       preferred_element_type=jnp.float32)          # (TB, E)
    ctx_rows = jnp.dot(onehot_x, emb_ref[...],
                       preferred_element_type=jnp.float32)          # (TB, E)
    dots = jnp.sum(cen_rows * ctx_rows, axis=-1)                    # (TB,)
    out_ref[...] = dots[None, :]                                    # lane-dense


# ---------------------------------------------------------------------------
# Path "loop": VMEM-resident table, fused scalar gather * multiply loop.
def _w2v_loop_kernel(cen_ids_ref, ctx_ids_ref,   # SMEM scalar prefetch (Bp,)
                     emb_ref,                    # VMEM (V_pad, E_pad), resident
                     out_ref,                    # VMEM (1, TB) lane-dense out
                     prod_tile):                 # VMEM (TB, E_pad) f32 scratch
    tb = out_ref.shape[-1]
    base = pl.program_id(0) * tb

    def gather_mul(j, carry):
        c = cen_ids_ref[base + j]
        x = ctx_ids_ref[base + j]
        # Fused gather*multiply: a single lane-dense (1, E_pad) store per row.
        prod_tile[pl.ds(j, 1), :] = (
            emb_ref[pl.ds(c, 1), :].astype(jnp.float32)
            * emb_ref[pl.ds(x, 1), :].astype(jnp.float32))
        return carry

    lax.fori_loop(0, tb, gather_mul, 0, unroll=16)
    out_ref[...] = jnp.sum(prod_tile[...], axis=-1)[None, :]


# ---------------------------------------------------------------------------
# Path "hbm": table stays in HBM; batched row-gather DMAs, NBUF-deep buffering.
def _w2v_hbm_kernel(cen_ids_ref, ctx_ids_ref,    # SMEM scalar prefetch (Bp,)
                    emb_hbm,                     # (V_pad, E_pad) ref in HBM
                    out_ref,                     # VMEM (1, TB)
                    cen_buf, ctx_buf,            # VMEM (NBUF, 1, E_pad)
                    sems,                        # DMA semaphores (2, NBUF)
                    prod_tile):                  # VMEM (TB, E_pad) f32
    tb = out_ref.shape[-1]
    nbuf = cen_buf.shape[0]
    base = pl.program_id(0) * tb

    def issue(j, slot):
        c = cen_ids_ref[base + j]
        x = ctx_ids_ref[base + j]
        pltpu.make_async_copy(emb_hbm.at[pl.ds(c, 1), :], cen_buf.at[slot],
                              sems.at[0, slot]).start()
        pltpu.make_async_copy(emb_hbm.at[pl.ds(x, 1), :], ctx_buf.at[slot],
                              sems.at[1, slot]).start()

    # Prime the pipeline: first nbuf row pairs (static slots).
    for j in range(nbuf):
        issue(j, j)

    @pl.loop(0, tb)
    def _(j):
        slot = j % nbuf
        pltpu.make_async_copy(emb_hbm.at[pl.ds(0, 1), :], cen_buf.at[slot],
                              sems.at[0, slot]).wait()
        pltpu.make_async_copy(emb_hbm.at[pl.ds(0, 1), :], ctx_buf.at[slot],
                              sems.at[1, slot]).wait()
        # Consume the slot before re-issuing the next gather into it.
        prod_tile[pl.ds(j, 1), :] = (cen_buf[slot].astype(jnp.float32)
                                     * ctx_buf[slot].astype(jnp.float32))

        @pl.when(j + nbuf < tb)
        def _():
            issue(j + nbuf, slot)

    out_ref[...] = jnp.sum(prod_tile[...], axis=-1)[None, :]


# ---------------------------------------------------------------------------
# Wrapper
def _vmem_capacity_bytes() -> int:
    """Physical VMEM per TensorCore (128 MiB v5e/v6e, 64 MiB v7x)."""
    try:
        cap = int(pltpu.get_tpu_info().vmem_capacity_bytes)
        if cap > 0:
            return cap
    except Exception:
        pass
    return 64 * 1024 * 1024  # conservative: assume the tightest generation


def _table_spec(v_pad, e_pad, index_map, single_buffer):
    """BlockSpec for the resident table; its block index is constant, so a
    single buffer is enough (halves the table's VMEM reservation)."""
    if single_buffer:
        try:
            return pl.BlockSpec((v_pad, e_pad), index_map,
                                pipeline_mode=pl.Buffered(1))
        except Exception:
            pass  # jax version without pipeline_mode -> default buffering
    return pl.BlockSpec((v_pad, e_pad), index_map)


def word2vec_neg_sampling(embedding, central_word, context_word, *,
                          tb=None, path=None, table_dtype=None):
    """embedding: [V, E] float; central/context_word: [B] int -> [B] float32.

    path: None (auto) | "onehot" | "loop" | "hbm".
    table_dtype: None keeps float32; jnp.bfloat16 halves table VMEM / HBM
        traffic (v7x capacity lever); product & reduction stay float32.
    """
    V, E = embedding.shape
    B = int(central_word.shape[0])
    assert B > 0

    table_dtype = jnp.float32 if table_dtype is None else jnp.dtype(table_dtype)
    itemsize = jnp.dtype(table_dtype).itemsize

    # Batch tile: lane-dense, big enough to amortize per-grid-step overhead,
    # but yielding >= 2 grid tiles when B allows (so both v7x cores work).
    if tb is None:
        tb = min(512, max(128, _round_up((B + 1) // 2, 128)))
    assert tb % 128 == 0, "batch tile must be lane-dense (multiple of 128)"
    num_tiles = -(-B // tb)
    bp = num_tiles * tb

    # Layout padding: lanes to 128, sublanes to 8 (zeros are dot-neutral).
    e_pad = _round_up(E, 128)
    v_pad = _round_up(V, 8)

    # Clamp indices: Pallas has no runtime OOB check on VMEM refs.
    # TODO(synk): nn.Embedding raises on out-of-range ids; we clamp instead.
    cen = jnp.clip(central_word.astype(jnp.int32), 0, V - 1)
    ctx = jnp.clip(context_word.astype(jnp.int32), 0, V - 1)
    cen = jnp.zeros((bp,), jnp.int32).at[:B].set(cen)   # pad slots -> row 0
    ctx = jnp.zeros((bp,), jnp.int32).at[:B].set(ctx)

    emb = jnp.zeros((v_pad, e_pad), table_dtype).at[:V, :E].set(
        embedding.astype(table_dtype))

    # ---- layout-aware VMEM accounting (bytes per TensorCore) -------------
    cap = _vmem_capacity_bytes()
    budget = int(0.8 * cap)
    headroom = 2 << 20
    table_bytes = v_pad * e_pad * itemsize               # single-buffered
    prod_bytes = tb * e_pad * 4
    out_bytes = 2 * 8 * tb * 4                           # (1, TB), 2 buffers
    ids_vmem = 2 * 2 * tb * 128 * 4                      # (TB,1) id blocks
    onehot_tmp = 2 * tb * v_pad * 4 + 2 * tb * e_pad * 4

    loop_need = table_bytes + prod_bytes + out_bytes + headroom
    onehot_need = table_bytes + ids_vmem + onehot_tmp + out_bytes + headroom
    hbm_need = (2 * _HBM_NBUF * 8 * e_pad * itemsize + prod_bytes + out_bytes
                + headroom)

    # ---- path selection ---------------------------------------------------
    if path is None:
        # When V >> 2*B the resident path would DMA the whole O(V*E) table
        # per call even though only O(B*E) rows are touched.
        prefer_hbm = v_pad > _HBM_GATHER_FACTOR * 2 * bp
        if prefer_hbm or loop_need > budget:
            path = "hbm"
        elif v_pad <= _ONEHOT_MAX_V and onehot_need <= budget:
            path = "onehot"
        else:
            path = "loop"

    needed = {"onehot": onehot_need, "loop": loop_need, "hbm": hbm_need}[path]
    vmem_limit = int(min(max(needed + (4 << 20), 32 << 20), cap))

    cparams = pltpu.CompilerParams(
        dimension_semantics=("parallel",),   # batch tiles are independent
        vmem_limit_bytes=vmem_limit,
    )
    out_shape = jax.ShapeDtypeStruct((num_tiles, tb), jnp.float32)

    if path == "onehot":
        cen2 = cen.reshape(bp, 1)
        ctx2 = ctx.reshape(bp, 1)

        def run(single_buffer):
            return pl.pallas_call(
                _w2v_onehot_kernel,
                out_shape=out_shape,
                grid_spec=pltpu.PrefetchScalarGridSpec(
                    num_scalar_prefetch=0,
                    grid=(num_tiles,),
                    in_specs=[
                        pl.BlockSpec((tb, 1), lambda t: (t, 0)),
                        pl.BlockSpec((tb, 1), lambda t: (t, 0)),
                        _table_spec(v_pad, e_pad, lambda t: (0, 0),
                                    single_buffer),
                    ],
                    out_specs=pl.BlockSpec((1, tb), lambda t: (t, 0)),
                ),
                compiler_params=cparams,
            )(cen2, ctx2, emb)

        try:
            out = run(True)
        except Exception:       # pl.Buffered(1) unsupported -> default buffering
            out = run(False)

    elif path == "loop":
        def run(single_buffer):
            return pl.pallas_call(
                _w2v_loop_kernel,
                out_shape=out_shape,
                grid_spec=pltpu.PrefetchScalarGridSpec(
                    num_scalar_prefetch=2,
                    grid=(num_tiles,),
                    in_specs=[
                        _table_spec(v_pad, e_pad, lambda t, c, x: (0, 0),
                                    single_buffer),
                    ],
                    out_specs=pl.BlockSpec((1, tb), lambda t, c, x: (t, 0)),
                    scratch_shapes=[pltpu.VMEM((tb, e_pad), jnp.float32)],
                ),
                compiler_params=cparams,
            )(cen, ctx, emb)

        try:
            out = run(True)
        except Exception:       # pl.Buffered(1) unsupported -> default buffering
            out = run(False)

    else:  # "hbm"
        out = pl.pallas_call(
            _w2v_hbm_kernel,
            out_shape=out_shape,
            grid_spec=pltpu.PrefetchScalarGridSpec(
                num_scalar_prefetch=2,
                grid=(num_tiles,),
                in_specs=[pl.BlockSpec(memory_space=pl.ANY)],
                out_specs=pl.BlockSpec((1, tb), lambda t, c, x: (t, 0)),
                scratch_shapes=[
                    pltpu.VMEM((_HBM_NBUF, 1, e_pad), table_dtype),
                    pltpu.VMEM((_HBM_NBUF, 1, e_pad), table_dtype),
                    pltpu.SemaphoreType.DMA((2, _HBM_NBUF)),
                    pltpu.VMEM((tb, e_pad), jnp.float32),
                ],
            ),
            compiler_params=cparams,
        )(cen, ctx, emb)

    return out.reshape(-1)[:B]


if __name__ == "__main__":
    vocab_size = 64
    embedding_size = 32
    batch = 8

    key = jax.random.PRNGKey(0)
    k_emb, k_cen, k_ctx = jax.random.split(key, 3)

    # nn.Embedding default init: N(0, 1)
    embedding = jax.random.normal(k_emb, (vocab_size, embedding_size), jnp.float32)
    central_word = jax.random.randint(k_cen, (batch,), 0, vocab_size, jnp.int32)
    context_word = jax.random.randint(k_ctx, (batch,), 0, vocab_size, jnp.int32)

    # pure-JAX reference
    ref = jnp.sum(embedding[central_word] * embedding[context_word], axis=1)

    # Exercise the auto-selected path plus each explicit path.
    for p in (None, "onehot", "loop", "hbm"):
        result = word2vec_neg_sampling(embedding, central_word, context_word,
                                       path=p)
        result = jax.block_until_ready(result)
        assert result.shape == (batch,), (p, result.shape)
        assert jnp.allclose(result, ref, atol=1e-5, rtol=1e-5), p

    # bf16-table variant (v7x VMEM-capacity lever); looser tolerance since the
    # table itself is quantized, accumulation stays f32.
    result_bf16 = jax.block_until_ready(
        word2vec_neg_sampling(embedding, central_word, context_word,
                              table_dtype=jnp.bfloat16))
    assert jnp.allclose(result_bf16, ref, atol=0.2, rtol=0.02)

    print("KERNEL_OK")
</pallas_src>

<mosaic_0001>
module attributes {stable_mosaic.version = 11 : i64} {
  func.func @_w2v_onehot_kernel(%arg0: i32, %arg1: memref<128x1xi32, #tpu.memory_space<vmem>>, %arg2: memref<128x1xi32, #tpu.memory_space<vmem>>, %arg3: memref<64x128xf32, #tpu.memory_space<vmem>>, %arg4: memref<1x128xf32, #tpu.memory_space<vmem>>) attributes {dimension_semantics = [#tpu.dimension_semantics<parallel>], iteration_bounds = array<i64: 1>, scalar_prefetch = 0 : i64, scratch_operands = 0 : i64, tpu.core_type = #tpu.core_type<tc>, window_params = [{transform_indices = @transform_0, window_bounds = array<i64: 128, 1>}, {transform_indices = @transform_1, window_bounds = array<i64: 128, 1>}, {pipeline_mode = #tpu.pipeline_mode<synchronous>, transform_indices = @transform_2, window_bounds = array<i64: 64, 128>}, {transform_indices = @transform_3, window_bounds = array<i64: 1, 128>}]} {
    %0 = tpu.iota {dimensions = array<i32: 1>} : vector<128x64xi32>
    %c0 = arith.constant 0 : index
    %c0_0 = arith.constant 0 : index
    %1 = vector.load %arg1[%c0, %c0_0] : memref<128x1xi32, #tpu.memory_space<vmem>>, vector<128x1xi32>
    %2 = vector.broadcast %1 : vector<128x1xi32> to vector<128x64xi32>
    %3 = arith.cmpi eq, %0, %2 : vector<128x64xi32>
    %4 = arith.extui %3 : vector<128x64xi1> to vector<128x64xi32>
    %5 = arith.sitofp %4 : vector<128x64xi32> to vector<128x64xf32>
    %c0_1 = arith.constant 0 : index
    %c0_2 = arith.constant 0 : index
    %6 = vector.load %arg2[%c0_1, %c0_2] : memref<128x1xi32, #tpu.memory_space<vmem>>, vector<128x1xi32>
    %7 = vector.broadcast %6 : vector<128x1xi32> to vector<128x64xi32>
    %8 = arith.cmpi eq, %0, %7 : vector<128x64xi32>
    %9 = arith.extui %8 : vector<128x64xi1> to vector<128x64xi32>
    %10 = arith.sitofp %9 : vector<128x64xi32> to vector<128x64xf32>
    %c0_3 = arith.constant 0 : index
    %c0_4 = arith.constant 0 : index
    %11 = vector.load %arg3[%c0_3, %c0_4] : memref<64x128xf32, #tpu.memory_space<vmem>>, vector<64x128xf32>
    %cst = arith.constant dense<0.000000e+00> : vector<128x128xf32>
    %12 = tpu.matmul %5, %11, %cst {dimension_numbers = #tpu.dot_dimension_numbers<[1], [0], [0], [1], [0, 0, 1, 1], [], []>} : vector<128x64xf32>, vector<64x128xf32>, vector<128x128xf32> -> vector<128x128xf32>
    %c0_5 = arith.constant 0 : index
    %c0_6 = arith.constant 0 : index
    %13 = vector.load %arg3[%c0_5, %c0_6] : memref<64x128xf32, #tpu.memory_space<vmem>>, vector<64x128xf32>
    %cst_7 = arith.constant dense<0.000000e+00> : vector<128x128xf32>
    %14 = tpu.matmul %10, %13, %cst_7 {dimension_numbers = #tpu.dot_dimension_numbers<[1], [0], [0], [1], [0, 0, 1, 1], [], []>} : vector<128x64xf32>, vector<64x128xf32>, vector<128x128xf32> -> vector<128x128xf32>
    %15 = arith.mulf %12, %14 : vector<128x128xf32>
    %cst_8 = arith.constant dense<0.000000e+00> : vector<128xf32>
    %16 = vector.multi_reduction <add>, %15, %cst_8 [1] : vector<128x128xf32> to vector<128xf32>
    %17 = vector.shape_cast %16 : vector<128xf32> to vector<1x128xf32>
    %c0_9 = arith.constant 0 : index
    %c0_10 = arith.constant 0 : index
    %18 = vector.load %arg4[%c0_9, %c0_10] : memref<1x128xf32, #tpu.memory_space<vmem>>, vector<1x128xf32>
    tpu.vector_store %arg4[%c0_9, %c0_10], %17 {strides = array<i32>} : memref<1x128xf32, #tpu.memory_space<vmem>>, vector<1x128xf32>,
    return
  }
  func.func @transform_0(%arg0: i32) -> (i32, i32) {
    %c0_i32 = arith.constant 0 : i32
    %c0_i32_0 = arith.constant 0 : i32
    return %arg0, %c0_i32 : i32, i32
  }
  func.func @transform_1(%arg0: i32) -> (i32, i32) {
    %c0_i32 = arith.constant 0 : i32
    %c0_i32_0 = arith.constant 0 : i32
    return %arg0, %c0_i32 : i32, i32
  }
  func.func @transform_2(%arg0: i32) -> (i32, i32) {
    %c0_i32 = arith.constant 0 : i32
    %c0_i32_0 = arith.constant 0 : i32
    %c0_i32_1 = arith.constant 0 : i32
    return %c0_i32, %c0_i32_0 : i32, i32
  }
  func.func @transform_3(%arg0: i32) -> (i32, i32) {
    %c0_i32 = arith.constant 0 : i32
    %c0_i32_0 = arith.constant 0 : i32
    return %arg0, %c0_i32 : i32, i32
  }
}

module attributes {stable_mosaic.version = 11 : i64} {
  func.func @_w2v_onehot_kernel(%arg0: i32, %arg1: memref<128x1xi32, #tpu.memory_space<vmem>>, %arg2: memref<128x1xi32, #tpu.memory_space<vmem>>, %arg3: memref<64x128xf32, #tpu.memory_space<vmem>>, %arg4: memref<1x128xf32, #tpu.memory_space<vmem>>) attributes {dimension_semantics = [#tpu.dimension_semantics<parallel>], iteration_bounds = array<i64: 1>, scalar_prefetch = 0 : i64, scratch_operands = 0 : i64, tpu.core_type = #tpu.core_type<tc>, window_params = [{transform_indices = @transform_0, window_bounds = array<i64: 128, 1>}, {transform_indices = @transform_1, window_bounds = array<i64: 128, 1>}, {pipeline_mode = #tpu.pipeline_mode<synchronous>, transform_indices = @transform_2, window_bounds = array<i64: 64, 128>}, {transform_indices = @transform_3, window_bounds = array<i64: 1, 128>}]} {
    %0 = tpu.iota {dimensions = array<i32: 1>} : vector<128x64xi32>
    %c0 = arith.constant 0 : index
    %c0_0 = arith.constant 0 : index
    %1 = vector.load %arg1[%c0, %c0_0] : memref<128x1xi32, #tpu.memory_space<vmem>>, vector<128x1xi32>
    %2 = vector.broadcast %1 : vector<128x1xi32> to vector<128x64xi32>
    %3 = arith.cmpi eq, %0, %2 : vector<128x64xi32>
    %4 = arith.extui %3 : vector<128x64xi1> to vector<128x64xi32>
    %5 = arith.sitofp %4 : vector<128x64xi32> to vector<128x64xf32>
    %c0_1 = arith.constant 0 : index
    %c0_2 = arith.constant 0 : index
    %6 = vector.load %arg2[%c0_1, %c0_2] : memref<128x1xi32, #tpu.memory_space<vmem>>, vector<128x1xi32>
    %7 = vector.broadcast %6 : vector<128x1xi32> to vector<128x64xi32>
    %8 = arith.cmpi eq, %0, %7 : vector<128x64xi32>
    %9 = arith.extui %8 : vector<128x64xi1> to vector<128x64xi32>
    %10 = arith.sitofp %9 : vector<128x64xi32> to vector<128x64xf32>
    %c0_3 = arith.constant 0 : index
    %c0_4 = arith.constant 0 : index
    %11 = vector.load %arg3[%c0_3, %c0_4] : memref<64x128xf32, #tpu.memory_space<vmem>>, vector<64x128xf32>
    %cst = arith.constant dense<0.000000e+00> : vector<128x128xf32>
    %12 = tpu.matmul %5, %11, %cst {dimension_numbers = #tpu.dot_dimension_numbers<[1], [0], [0], [1], [0, 0, 1, 1], [], []>} : vector<128x64xf32>, vector<64x128xf32>, vector<128x128xf32> -> vector<128x128xf32>
    %c0_5 = arith.constant 0 : index
    %c0_6 = arith.constant 0 : index
    %13 = vector.load %arg3[%c0_5, %c0_6] : memref<64x128xf32, #tpu.memory_space<vmem>>, vector<64x128xf32>
    %cst_7 = arith.constant dense<0.000000e+00> : vector<128x128xf32>
    %14 = tpu.matmul %10, %13, %cst_7 {dimension_numbers = #tpu.dot_dimension_numbers<[1], [0], [0], [1], [0, 0, 1, 1], [], []>} : vector<128x64xf32>, vector<64x128xf32>, vector<128x128xf32> -> vector<128x128xf32>
    %15 = arith.mulf %12, %14 : vector<128x128xf32>
    %cst_8 = arith.constant dense<0.000000e+00> : vector<128xf32>
    %16 = vector.multi_reduction <add>, %15, %cst_8 [1] : vector<128x128xf32> to vector<128xf32>
    %17 = vector.shape_cast %16 : vector<128xf32> to vector<1x128xf32>
    %c0_9 = arith.constant 0 : index
    %c0_10 = arith.constant 0 : index
    %18 = vector.load %arg4[%c0_9, %c0_10] : memref<1x128xf32, #tpu.memory_space<vmem>>, vector<1x128xf32>
    tpu.vector_store %arg4[%c0_9, %c0_10], %17 {strides = array<i32>} : memref<1x128xf32, #tpu.memory_space<vmem>>, vector<1x128xf32>,
    return
  }
  func.func @transform_0(%arg0: i32) -> (i32, i32) {
    %c0_i32 = arith.constant 0 : i32
    %c0_i32_0 = arith.constant 0 : i32
    return %arg0, %c0_i32 : i32, i32
  }
  func.func @transform_1(%arg0: i32) -> (i32, i32) {
    %c0_i32 = arith.constant 0 : i32
    %c0_i32_0 = arith.constant 0 : i32
    return %arg0, %c0_i32 : i32, i32
  }
  func.func @transform_2(%arg0: i32) -> (i32, i32) {
    %c0_i32 = arith.constant 0 : i32
    %c0_i32_0 = arith.constant 0 : i32
    %c0_i32_1 = arith.constant 0 : i32
    return %c0_i32, %c0_i32_0 : i32, i32
  }
  func.func @transform_3(%arg0: i32) -> (i32, i32) {
    %c0_i32 = arith.constant 0 : i32
    %c0_i32_0 = arith.constant 0 : i32
    return %arg0, %c0_i32 : i32, i32
  }
}

</mosaic_0001>

<llo_original>
// kernel: tpu_custom_call.1
$region0: #{tpu_custom_call.1}
  #allocation0 [shape = 'u32[]', space=smem, size = 0x4, offset = 0x4, fixed_abs, tag = 'smem constant byte address 0x4 - core index']
  #allocation1 [shape = 'u32[72,128]{1,0:T(1,128)}', space=vmem, size = 0x9000, scoped, tag = 'internal scratch']
  %s0 = inlined_call_operand.vmem [shape: s32[128,1], index: 0, kind: input, shape index: {}]
  %s1 = inlined_call_operand.vmem [shape: s32[128,1], index: 1, kind: input, shape index: {}]
  %s2 = inlined_call_operand.vmem [shape: f32[64,128], index: 2, kind: input, shape index: {}]
  %s3 = inlined_call_operand.hbm [shape: f32[1,128], index: 3, kind: output, shape index: {}]
  %s4 = sld [smem:[#allocation0]]
  $region22: #{tpu_custom_call.1} parent=0
    _
  %s6 = ssub.s32 1, %s4
  %s7 = scalar_select 0, %s6, %s4
  $region1: #{tpu_custom_call.1} parent=0
    #allocation2 [shape = 'u8[512]{0}', space=vmem, size = 0x400, scoped, tag = 'output window, operand 0, single buffered']
    #allocation3 [shape = 's32[1]{0}', space=sflag, size = 0x4, scoped, tag = 'scoped memory for tpu_custom_call.1']
    %8 = vsyncpa [#allocation3], 0
    // Predicated region
    $region2: #{tpu_custom_call.1} parent=1 // pred_check
      _
    $region3: #{tpu_custom_call.1} parent=1 // pred_check_branch
      %10 = sbr.rel (0) target = $region5
    $region4: #{tpu_custom_call.1} parent=1 // pred_region
      _
    $region5: #{tpu_custom_call.1} parent=1 // pred_fallthru
      _
    // Predicated region
    $region6: #{tpu_custom_call.1} parent=1 // pred_check
      _
    $region7: #{tpu_custom_call.1} parent=1 // pred_check_branch
      %12 = sbr.rel (0) target = $region9
    $region8: #{tpu_custom_call.1} parent=1 // pred_region
      _
    $region9: #{tpu_custom_call.1} parent=1 // pred_fallthru
      _
    // Predicated region
    $region10: #{tpu_custom_call.1} parent=1 // pred_check
      _
    $region11: #{tpu_custom_call.1} parent=1 // pred_check_branch
      %14 = sbr.rel (0) target = $region13
    $region12: #{tpu_custom_call.1} parent=1 // pred_region
      _
    $region13: #{tpu_custom_call.1} parent=1 // pred_fallthru
      _
    %v15 = vlaneseq
    %v16 = vand.u32 %v15, 127
    %v17 = vld [vmem:[%s0] sm:$0xff]
    %v18 = vld [vmem:[%s0 + $0x8] sm:$0xff]
    %v19 = vld [vmem:[%s0 + $0x10] sm:$0xff]
    %v20 = vld [vmem:[%s0 + $0x18] sm:$0xff]
    %v21 = vld [vmem:[%s0 + $0x20] sm:$0xff]
    %v22 = vld [vmem:[%s0 + $0x28] sm:$0xff]
    %v23 = vld [vmem:[%s0 + $0x30] sm:$0xff]
    %v24 = vld [vmem:[%s0 + $0x38] sm:$0xff]
    %v25 = vld [vmem:[%s0 + $0x40] sm:$0xff]
    %v26 = vld [vmem:[%s0 + $0x48] sm:$0xff]
    %v27 = vld [vmem:[%s0 + $0x50] sm:$0xff]
    %v28 = vld [vmem:[%s0 + $0x58] sm:$0xff]
    %v29 = vld [vmem:[%s0 + $0x60] sm:$0xff]
    %v30 = vld [vmem:[%s0 + $0x68] sm:$0xff]
    %v31 = vld [vmem:[%s0 + $0x70] sm:$0xff]
    %v32 = vld [vmem:[%s0 + $0x78] sm:$0xff]
    %33 = vset.pattern.permute.xlu0 0
    %34 = vperm.xlu0 %33, %v17
    %v35 = vpop.permute.xlu0 %34
    %36 = vset.pattern.permute.xlu0 0
    %37 = vperm.xlu0 %36, %v18
    %v38 = vpop.permute.xlu0 %37
    %39 = vset.pattern.permute.xlu0 0
    %40 = vperm.xlu0 %39, %v19
    %v41 = vpop.permute.xlu0 %40
    %42 = vset.pattern.permute.xlu0 0
    %43 = vperm.xlu0 %42, %v20
    %v44 = vpop.permute.xlu0 %43
    %45 = vset.pattern.permute.xlu0 0
    %46 = vperm.xlu0 %45, %v21
    %v47 = vpop.permute.xlu0 %46
    %48 = vset.pattern.permute.xlu0 0
    %49 = vperm.xlu0 %48, %v22
    %v50 = vpop.permute.xlu0 %49
    %51 = vset.pattern.permute.xlu0 0
    %52 = vperm.xlu0 %51, %v23
    %v53 = vpop.permute.xlu0 %52
    %54 = vset.pattern.permute.xlu0 0
    %55 = vperm.xlu0 %54, %v24
    %v56 = vpop.permute.xlu0 %55
    %57 = vset.pattern.permute.xlu0 0
    %58 = vperm.xlu0 %57, %v25
    %v59 = vpop.permute.xlu0 %58
    %60 = vset.pattern.permute.xlu0 0
    %61 = vperm.xlu0 %60, %v26
    %v62 = vpop.permute.xlu0 %61
    %63 = vset.pattern.permute.xlu0 0
    %64 = vperm.xlu0 %63, %v27
    %v65 = vpop.permute.xlu0 %64
    %66 = vset.pattern.permute.xlu0 0
    %67 = vperm.xlu0 %66, %v28
    %v68 = vpop.permute.xlu0 %67
    %69 = vset.pattern.permute.xlu0 0
    %70 = vperm.xlu0 %69, %v29
    %v71 = vpop.permute.xlu0 %70
    %72 = vset.pattern.permute.xlu0 0
    %73 = vperm.xlu0 %72, %v30
    %v74 = vpop.permute.xlu0 %73
    %75 = vset.pattern.permute.xlu0 0
    %76 = vperm.xlu0 %75, %v31
    %v77 = vpop.permute.xlu0 %76
    %78 = vset.pattern.permute.xlu0 0
    %79 = vperm.xlu0 %78, %v32
    %v80 = vpop.permute.xlu0 %79
    %vm81 = vcmp.eq.s32.totalorder %v16, %v35
    %vm82 = vcmp.eq.s32.totalorder %v16, %v38
    %vm83 = vcmp.eq.s32.totalorder %v16, %v41
    %vm84 = vcmp.eq.s32.totalorder %v16, %v44
    %vm85 = vcmp.eq.s32.totalorder %v16, %v47
    %vm86 = vcmp.eq.s32.totalorder %v16, %v50
    %vm87 = vcmp.eq.s32.totalorder %v16, %v53
    %vm88 = vcmp.eq.s32.totalorder %v16, %v56
    %vm89 = vcmp.eq.s32.totalorder %v16, %v59
    %vm90 = vcmp.eq.s32.totalorder %v16, %v62
    %vm91 = vcmp.eq.s32.totalorder %v16, %v65
    %vm92 = vcmp.eq.s32.totalorder %v16, %v68
    %vm93 = vcmp.eq.s32.totalorder %v16, %v71
    %vm94 = vcmp.eq.s32.totalorder %v16, %v74
    %vm95 = vcmp.eq.s32.totalorder %v16, %v77
    %vm96 = vcmp.eq.s32.totalorder %v16, %v80
    %v97 = vsel %vm81, 1, 0
    %v98 = vsel %vm82, 1, 0
    %v99 = vsel %vm83, 1, 0
    %v100 = vsel %vm84, 1, 0
    %v101 = vsel %vm85, 1, 0
    %v102 = vsel %vm86, 1, 0
    %v103 = vsel %vm87, 1, 0
    %v104 = vsel %vm88, 1, 0
    %v105 = vsel %vm89, 1, 0
    %v106 = vsel %vm90, 1, 0
    %v107 = vsel %vm91, 1, 0
    %v108 = vsel %vm92, 1, 0
    %v109 = vsel %vm93, 1, 0
    %v110 = vsel %vm94, 1, 0
    %v111 = vsel %vm95, 1, 0
    %v112 = vsel %vm96, 1, 0
    %v113 = vcvt.s32.f32 %v97
    %v114 = vcvt.s32.f32 %v98
    %v115 = vcvt.s32.f32 %v99
    %v116 = vcvt.s32.f32 %v100
    %v117 = vcvt.s32.f32 %v101
    %v118 = vcvt.s32.f32 %v102
    %v119 = vcvt.s32.f32 %v103
    %v120 = vcvt.s32.f32 %v104
    %v121 = vcvt.s32.f32 %v105
    %v122 = vcvt.s32.f32 %v106
    %v123 = vcvt.s32.f32 %v107
    %v124 = vcvt.s32.f32 %v108
    %v125 = vcvt.s32.f32 %v109
    %v126 = vcvt.s32.f32 %v110
    %v127 = vcvt.s32.f32 %v111
    %v128 = vcvt.s32.f32 %v112
    %v129 = vld [vmem:[%s1] sm:$0xff]
    %v130 = vld [vmem:[%s1 + $0x8] sm:$0xff]
    %v131 = vld [vmem:[%s1 + $0x10] sm:$0xff]
    %v132 = vld [vmem:[%s1 + $0x18] sm:$0xff]
    %v133 = vld [vmem:[%s1 + $0x20] sm:$0xff]
    %v134 = vld [vmem:[%s1 + $0x28] sm:$0xff]
    %v135 = vld [vmem:[%s1 + $0x30] sm:$0xff]
    %v136 = vld [vmem:[%s1 + $0x38] sm:$0xff]
    %v137 = vld [vmem:[%s1 + $0x40] sm:$0xff]
    %v138 = vld [vmem:[%s1 + $0x48] sm:$0xff]
    %v139 = vld [vmem:[%s1 + $0x50] sm:$0xff]
    %v140 = vld [vmem:[%s1 + $0x58] sm:$0xff]
    %v141 = vld [vmem:[%s1 + $0x60] sm:$0xff]
    %v142 = vld [vmem:[%s1 + $0x68] sm:$0xff]
    %v143 = vld [vmem:[%s1 + $0x70] sm:$0xff]
    %v144 = vld [vmem:[%s1 + $0x78] sm:$0xff]
    %145 = vset.pattern.permute.xlu0 0
    %146 = vperm.xlu0 %145, %v129
    %v147 = vpop.permute.xlu0 %146
    %148 = vset.pattern.permute.xlu0 0
    %149 = vperm.xlu0 %148, %v130
    %v150 = vpop.permute.xlu0 %149
    %151 = vset.pattern.permute.xlu0 0
    %152 = vperm.xlu0 %151, %v131
    %v153 = vpop.permute.xlu0 %152
    %154 = vset.pattern.permute.xlu0 0
    %155 = vperm.xlu0 %154, %v132
    %v156 = vpop.permute.xlu0 %155
    %157 = vset.pattern.permute.xlu0 0
    %158 = vperm.xlu0 %157, %v133
    %v159 = vpop.permute.xlu0 %158
    %160 = vset.pattern.permute.xlu0 0
    %161 = vperm.xlu0 %160, %v134
    %v162 = vpop.permute.xlu0 %161
    %163 = vset.pattern.permute.xlu0 0
    %164 = vperm.xlu0 %163, %v135
    %v165 = vpop.permute.xlu0 %164
    %166 = vset.pattern.permute.xlu0 0
    %167 = vperm.xlu0 %166, %v136
    %v168 = vpop.permute.xlu0 %167
    %169 = vset.pattern.permute.xlu0 0
    %170 = vperm.xlu0 %169, %v137
    %v171 = vpop.permute.xlu0 %170
    %172 = vset.pattern.permute.xlu0 0
    %173 = vperm.xlu0 %172, %v138
    %v174 = vpop.permute.xlu0 %173
    %175 = vset.pattern.permute.xlu0 0
    %176 = vperm.xlu0 %175, %v139
    %v177 = vpop.permute.xlu0 %176
    %178 = vset.pattern.permute.xlu0 0
    %179 = vperm.xlu0 %178, %v140
    %v180 = vpop.permute.xlu0 %179
    %181 = vset.pattern.permute.xlu0 0
    %182 = vperm.xlu0 %181, %v141
    %v183 = vpop.permute.xlu0 %182
    %184 = vset.pattern.permute.xlu0 0
    %185 = vperm.xlu0 %184, %v142
    %v186 = vpop.permute.xlu0 %185
    %187 = vset.pattern.permute.xlu0 0
    %188 = vperm.xlu0 %187, %v143
    %v189 = vpop.permute.xlu0 %188
    %190 = vset.pattern.permute.xlu0 0
    %191 = vperm.xlu0 %190, %v144
    %v192 = vpop.permute.xlu0 %191
    %vm193 = vcmp.eq.s32.totalorder %v16, %v147
    %vm194 = vcmp.eq.s32.totalorder %v16, %v150
    %vm195 = vcmp.eq.s32.totalorder %v16, %v153
    %vm196 = vcmp.eq.s32.totalorder %v16, %v156
    %vm197 = vcmp.eq.s32.totalorder %v16, %v159
    %vm198 = vcmp.eq.s32.totalorder %v16, %v162
    %vm199 = vcmp.eq.s32.totalorder %v16, %v165
    %vm200 = vcmp.eq.s32.totalorder %v16, %v168
    %vm201 = vcmp.eq.s32.totalorder %v16, %v171
    %vm202 = vcmp.eq.s32.totalorder %v16, %v174
    %vm203 = vcmp.eq.s32.totalorder %v16, %v177
    %vm204 = vcmp.eq.s32.totalorder %v16, %v180
    %vm205 = vcmp.eq.s32.totalorder %v16, %v183
    %vm206 = vcmp.eq.s32.totalorder %v16, %v186
    %vm207 = vcmp.eq.s32.totalorder %v16, %v189
    %vm208 = vcmp.eq.s32.totalorder %v16, %v192
    %v209 = vsel %vm193, 1, 0
    %v210 = vsel %vm194, 1, 0
    %v211 = vsel %vm195, 1, 0
    %v212 = vsel %vm196, 1, 0
    %v213 = vsel %vm197, 1, 0
    %v214 = vsel %vm198, 1, 0
    %v215 = vsel %vm199, 1, 0
    %v216 = vsel %vm200, 1, 0
    %v217 = vsel %vm201, 1, 0
    %v218 = vsel %vm202, 1, 0
    %v219 = vsel %vm203, 1, 0
    %v220 = vsel %vm204, 1, 0
    %v221 = vsel %vm205, 1, 0
    %v222 = vsel %vm206, 1, 0
    %v223 = vsel %vm207, 1, 0
    %v224 = vsel %vm208, 1, 0
    %v225 = vcvt.s32.f32 %v209
    %v226 = vcvt.s32.f32 %v210
    %v227 = vcvt.s32.f32 %v211
    %v228 = vcvt.s32.f32 %v212
    %v229 = vcvt.s32.f32 %v213
    %v230 = vcvt.s32.f32 %v214
    %v231 = vcvt.s32.f32 %v215
    %v232 = vcvt.s32.f32 %v216
    %v233 = vcvt.s32.f32 %v217
    %v234 = vcvt.s32.f32 %v218
    %v235 = vcvt.s32.f32 %v219
    %v236 = vcvt.s32.f32 %v220
    %v237 = vcvt.s32.f32 %v221
    %v238 = vcvt.s32.f32 %v222
    %v239 = vcvt.s32.f32 %v223
    %v240 = vcvt.s32.f32 %v224
    %v241 = vld [vmem:[%s2] sm:$0xff]
    %v242 = vld [vmem:[%s2 + $0x8] sm:$0xff]
    %v243 = vld [vmem:[%s2 + $0x10] sm:$0xff]
    %v244 = vld [vmem:[%s2 + $0x18] sm:$0xff]
    %v245 = vld [vmem:[%s2 + $0x20] sm:$0xff]
    %v246 = vld [vmem:[%s2 + $0x28] sm:$0xff]
    %v247 = vld [vmem:[%s2 + $0x30] sm:$0xff]
    %v248 = vld [vmem:[%s2 + $0x38] sm:$0xff]
    %vm249 = vcmask 523264
    %v251 = vsel %vm249, %v113, 0
    %v254 = vsel %vm249, %v114, 0
    %v257 = vsel %vm249, %v115, 0
    %v260 = vsel %vm249, %v116, 0
    %v263 = vsel %vm249, %v117, 0
    %v266 = vsel %vm249, %v118, 0
    %v269 = vsel %vm249, %v119, 0
    %v272 = vsel %vm249, %v120, 0
    %v275 = vsel %vm249, %v121, 0
    %v278 = vsel %vm249, %v122, 0
    %v281 = vsel %vm249, %v123, 0
    %v284 = vsel %vm249, %v124, 0
    %v287 = vsel %vm249, %v125, 0
    %v290 = vsel %vm249, %v126, 0
    %v293 = vsel %vm249, %v127, 0
    %v296 = vsel %vm249, %v128, 0
    %298 = vmatpush.msra.mxu0 0.0
    %299 = vmatpush.msra.mxu0 0.0
    %300 = vmatpush.msra.mxu0 0.0
    %301 = vmatpush.msra.mxu0 0.0
    %302 = vmatpush.msra.mxu0 0.0
    %303 = vmatpush.msra.mxu0 0.0
    %304 = vmatpush.msra.mxu0 0.0
    %305 = vmatpush.msra.mxu0 0.0
    %306 = vmatpush.msra.mxu0 %v248
    %307 = vmatpush.msra.mxu0 %v247
    %308 = vmatpush.msra.mxu0 %v246
    %309 = vmatpush.msra.mxu0 %v245
    %310 = vmatpush.msra.mxu0 %v244
    %311 = vmatpush.msra.mxu0 %v243
    %312 = vmatpush.msra.mxu0 %v242
    %313 = vmatpush.msra.mxu0 %v241
    %314 = vmatmul.f32.gmra.mxu0 %v251
    %v315 = vpop.f32.mrf.mxu0
    %v316 = vadd.f32 0.0, %v315
    %317 = vmatmul.f32.gmra.mxu0 %v254
    %v318 = vpop.f32.mrf.mxu0
    %v319 = vadd.f32 0.0, %v318
    %320 = vmatmul.f32.gmra.mxu0 %v257
    %v321 = vpop.f32.mrf.mxu0
    %v322 = vadd.f32 0.0, %v321
    %323 = vmatmul.f32.gmra.mxu0 %v260
    %v324 = vpop.f32.mrf.mxu0
    %v325 = vadd.f32 0.0, %v324
    %326 = vmatmul.f32.gmra.mxu0 %v263
    %v327 = vpop.f32.mrf.mxu0
    %v328 = vadd.f32 0.0, %v327
    %329 = vmatmul.f32.gmra.mxu0 %v266
    %v330 = vpop.f32.mrf.mxu0
    %v331 = vadd.f32 0.0, %v330
    %332 = vmatmul.f32.gmra.mxu0 %v269
    %v333 = vpop.f32.mrf.mxu0
    %v334 = vadd.f32 0.0, %v333
    %335 = vmatmul.f32.gmra.mxu0 %v272
    %v336 = vpop.f32.mrf.mxu0
    %v337 = vadd.f32 0.0, %v336
    %338 = vmatmul.f32.gmra.mxu0 %v275
    %v339 = vpop.f32.mrf.mxu0
    %v340 = vadd.f32 0.0, %v339
    %341 = vmatmul.f32.gmra.mxu0 %v278
    %v342 = vpop.f32.mrf.mxu0
    %v343 = vadd.f32 0.0, %v342
    %344 = vmatmul.f32.gmra.mxu0 %v281
    %v345 = vpop.f32.mrf.mxu0
    %v346 = vadd.f32 0.0, %v345
    %347 = vmatmul.f32.gmra.mxu0 %v284
    %v348 = vpop.f32.mrf.mxu0
    %v349 = vadd.f32 0.0, %v348
    %350 = vmatmul.f32.gmra.mxu0 %v287
    %v351 = vpop.f32.mrf.mxu0
    %v352 = vadd.f32 0.0, %v351
    %353 = vmatmul.f32.gmra.mxu0 %v290
    %v354 = vpop.f32.mrf.mxu0
    %v355 = vadd.f32 0.0, %v354
    %356 = vmatmul.f32.gmra.mxu0 %v293
    %v357 = vpop.f32.mrf.mxu0
    %v358 = vadd.f32 0.0, %v357
    %359 = vmatmul.f32.gmra.mxu0 %v296
    %v360 = vpop.f32.mrf.mxu0
    %v361 = vadd.f32 0.0, %v360
    %362 = vdwg.mxu0
    %v364 = vsel %vm249, %v225, 0
    %v367 = vsel %vm249, %v226, 0
    %v370 = vsel %vm249, %v227, 0
    %v373 = vsel %vm249, %v228, 0
    %v376 = vsel %vm249, %v229, 0
    %v379 = vsel %vm249, %v230, 0
    %v382 = vsel %vm249, %v231, 0
    %v385 = vsel %vm249, %v232, 0
    %v388 = vsel %vm249, %v233, 0
    %v391 = vsel %vm249, %v234, 0
    %v394 = vsel %vm249, %v235, 0
    %v397 = vsel %vm249, %v236, 0
    %v400 = vsel %vm249, %v237, 0
    %v403 = vsel %vm249, %v238, 0
    %v406 = vsel %vm249, %v239, 0
    %v409 = vsel %vm249, %v240, 0
    %411 = vmatpush.msra.mxu0 0.0
    %412 = vmatpush.msra.mxu0 0.0
    %413 = vmatpush.msra.mxu0 0.0
    %414 = vmatpush.msra.mxu0 0.0
    %415 = vmatpush.msra.mxu0 0.0
    %416 = vmatpush.msra.mxu0 0.0
    %417 = vmatpush.msra.mxu0 0.0
    %418 = vmatpush.msra.mxu0 0.0
    %419 = vmatpush.msra.mxu0 %v248
    %420 = vmatpush.msra.mxu0 %v247
    %421 = vmatpush.msra.mxu0 %v246
    %422 = vmatpush.msra.mxu0 %v245
    %423 = vmatpush.msra.mxu0 %v244
    %424 = vmatpush.msra.mxu0 %v243
    %425 = vmatpush.msra.mxu0 %v242
    %426 = vmatpush.msra.mxu0 %v241
    %427 = vmatmul.f32.gmra.mxu0 %v364
    %v428 = vpop.f32.mrf.mxu0
    %v429 = vadd.f32 0.0, %v428
    %430 = vmatmul.f32.gmra.mxu0 %v367
    %v431 = vpop.f32.mrf.mxu0
    %v432 = vadd.f32 0.0, %v431
    %433 = vmatmul.f32.gmra.mxu0 %v370
    %v434 = vpop.f32.mrf.mxu0
    %v435 = vadd.f32 0.0, %v434
    %436 = vmatmul.f32.gmra.mxu0 %v373
    %v437 = vpop.f32.mrf.mxu0
    %v438 = vadd.f32 0.0, %v437
    %439 = vmatmul.f32.gmra.mxu0 %v376
    %v440 = vpop.f32.mrf.mxu0
    %v441 = vadd.f32 0.0, %v440
    %442 = vmatmul.f32.gmra.mxu0 %v379
    %v443 = vpop.f32.mrf.mxu0
    %v444 = vadd.f32 0.0, %v443
    %445 = vmatmul.f32.gmra.mxu0 %v382
    %v446 = vpop.f32.mrf.mxu0
    %v447 = vadd.f32 0.0, %v446
    %448 = vmatmul.f32.gmra.mxu0 %v385
    %v449 = vpop.f32.mrf.mxu0
    %v450 = vadd.f32 0.0, %v449
    %451 = vmatmul.f32.gmra.mxu0 %v388
    %v452 = vpop.f32.mrf.mxu0
    %v453 = vadd.f32 0.0, %v452
    %454 = vmatmul.f32.gmra.mxu0 %v391
    %v455 = vpop.f32.mrf.mxu0
    %v456 = vadd.f32 0.0, %v455
    %457 = vmatmul.f32.gmra.mxu0 %v394
    %v458 = vpop.f32.mrf.mxu0
    %v459 = vadd.f32 0.0, %v458
    %460 = vmatmul.f32.gmra.mxu0 %v397
    %v461 = vpop.f32.mrf.mxu0
    %v462 = vadd.f32 0.0, %v461
    %463 = vmatmul.f32.gmra.mxu0 %v400
    %v464 = vpop.f32.mrf.mxu0
    %v465 = vadd.f32 0.0, %v464
    %466 = vmatmul.f32.gmra.mxu0 %v403
    %v467 = vpop.f32.mrf.mxu0
    %v468 = vadd.f32 0.0, %v467
    %469 = vmatmul.f32.gmra.mxu0 %v406
    %v470 = vpop.f32.mrf.mxu0
    %v471 = vadd.f32 0.0, %v470
    %472 = vmatmul.f32.gmra.mxu0 %v409
    %v473 = vpop.f32.mrf.mxu0
    %v474 = vadd.f32 0.0, %v473
    %475 = vdwg.mxu0
    %v476 = vmul.f32 %v316, %v429
    %v477 = vmul.f32 %v319, %v432
    %v478 = vmul.f32 %v322, %v435
    %v479 = vmul.f32 %v325, %v438
    %v480 = vmul.f32 %v328, %v441
    %v481 = vmul.f32 %v331, %v444
    %v482 = vmul.f32 %v334, %v447
    %v483 = vmul.f32 %v337, %v450
    %v484 = vmul.f32 %v340, %v453
    %v485 = vmul.f32 %v343, %v456
    %v486 = vmul.f32 %v346, %v459
    %v487 = vmul.f32 %v349, %v462
    %v488 = vmul.f32 %v352, %v465
    %v489 = vmul.f32 %v355, %v468
    %v490 = vmul.f32 %v358, %v471
    %v491 = vmul.f32 %v361, %v474
    %492 = vadd.xlane.f32.xlu0 %v476
    %v493 = vpop.xlane.xlu0 %492
    %494 = vadd.xlane.f32.xlu0 %v477
    %v495 = vpop.xlane.xlu0 %494
    %496 = vadd.xlane.f32.xlu0 %v478
    %v497 = vpop.xlane.xlu0 %496
    %498 = vadd.xlane.f32.xlu0 %v479
    %v499 = vpop.xlane.xlu0 %498
    %500 = vadd.xlane.f32.xlu0 %v480
    %v501 = vpop.xlane.xlu0 %500
    %502 = vadd.xlane.f32.xlu0 %v481
    %v503 = vpop.xlane.xlu0 %502
    %504 = vadd.xlane.f32.xlu0 %v482
    %v505 = vpop.xlane.xlu0 %504
    %506 = vadd.xlane.f32.xlu0 %v483
    %v507 = vpop.xlane.xlu0 %506
    %508 = vadd.xlane.f32.xlu0 %v484
    %v509 = vpop.xlane.xlu0 %508
    %510 = vadd.xlane.f32.xlu0 %v485
    %v511 = vpop.xlane.xlu0 %510
    %512 = vadd.xlane.f32.xlu0 %v486
    %v513 = vpop.xlane.xlu0 %512
    %514 = vadd.xlane.f32.xlu0 %v487
    %v515 = vpop.xlane.xlu0 %514
    %516 = vadd.xlane.f32.xlu0 %v488
    %v517 = vpop.xlane.xlu0 %516
    %518 = vadd.xlane.f32.xlu0 %v489
    %v519 = vpop.xlane.xlu0 %518
    %520 = vadd.xlane.f32.xlu0 %v490
    %v521 = vpop.xlane.xlu0 %520
    %522 = vadd.xlane.f32.xlu0 %v491
    %v523 = vpop.xlane.xlu0 %522
    %v540 = vperm.slane %v493, %v16
    %v541 = vadd.s32 %v16, 4294967288
    %v542 = vperm.slane %v495, %v541
    %vm543 = vcmask 130112
    %v544 = vsel %vm543, %v542, %v540
    %v545 = vadd.s32 %v16, 4294967280
    %v546 = vperm.slane %v497, %v545
    %vm547 = vcmask 195712
    %v548 = vsel %vm547, %v546, %v544
    %v549 = vadd.s32 %v16, 4294967272
    %v550 = vperm.slane %v499, %v549
    %vm551 = vcmask 261312
    %v552 = vsel %vm551, %v550, %v548
    %v553 = vadd.s32 %v16, 4294967264
    %v554 = vperm.slane %v501, %v553
    %vm555 = vcmask 326912
    %v556 = vsel %vm555, %v554, %v552
    %v557 = vadd.s32 %v16, 4294967256
    %v558 = vperm.slane %v503, %v557
    %vm559 = vcmask 392512
    %v560 = vsel %vm559, %v558, %v556
    %v561 = vadd.s32 %v16, 4294967248
    %v562 = vperm.slane %v505, %v561
    %vm563 = vcmask 458112
    %v564 = vsel %vm563, %v562, %v560
    %v565 = vadd.s32 %v16, 4294967240
    %v566 = vperm.slane %v507, %v565
    %vm567 = vcmask 523712
    %v568 = vsel %vm567, %v566, %v564
    %v569 = vadd.s32 %v16, 4294967232
    %v570 = vperm.slane %v509, %v569
    %vm571 = vcmask 589312
    %v572 = vsel %vm571, %v570, %v568
    %v573 = vadd.s32 %v16, 4294967224
    %v574 = vperm.slane %v511, %v573
    %vm575 = vcmask 654912
    %v576 = vsel %vm575, %v574, %v572
    %v577 = vadd.s32 %v16, 4294967216
    %v578 = vperm.slane %v513, %v577
    %vm579 = vcmask 720512
    %v580 = vsel %vm579, %v578, %v576
    %v581 = vadd.s32 %v16, 4294967208
    %v582 = vperm.slane %v515, %v581
    %vm583 = vcmask 786112
    %v584 = vsel %vm583, %v582, %v580
    %v585 = vadd.s32 %v16, 4294967200
    %v586 = vperm.slane %v517, %v585
    %vm587 = vcmask 851712
    %v588 = vsel %vm587, %v586, %v584
    %v589 = vadd.s32 %v16, 4294967192
    %v590 = vperm.slane %v519, %v589
    %vm591 = vcmask 917312
    %v592 = vsel %vm591, %v590, %v588
    %v593 = vadd.s32 %v16, 4294967184
    %v594 = vperm.slane %v521, %v593
    %vm595 = vcmask 982912
    %v596 = vsel %vm595, %v594, %v592
    %v597 = vadd.s32 %v16, 4294967176
    %v598 = vperm.slane %v523, %v597
    %vm599 = vcmask 1048512
    %v600 = vsel %vm599, %v598, %v596
    %602 = vst [vmem:[#allocation2] sm:$0x1] %v600
    // Predicated region
    $region14: #{tpu_custom_call.1} parent=1 // pred_check
      _
    $region15: #{tpu_custom_call.1} parent=1 // pred_check_branch
      %604 = sbr.rel (0) target = $region17
    $region16: #{tpu_custom_call.1} parent=1 // pred_region
      %606 = vsyncadd [#allocation3], 0
      %s608 = sshll.u32 [#allocation2], 4
      %s609 = int_to_ptr.vmem [resolvable:$true] %s608
      %s610 = sshll.u32 %s3, 4
      %s611 = int_to_ptr.hbm [resolvable:$true] %s610
      %613 = dma.vmem_to_hbm [thread:$0]  %s609, 16, %s611, [#allocation3]
    $region17: #{tpu_custom_call.1} parent=1 // pred_fallthru
      _
    // Predicated region
    $region18: #{tpu_custom_call.1} parent=1 // pred_check
      _
    $region19: #{tpu_custom_call.1} parent=1 // pred_check_branch
      %615 = sbr.rel (0) target = $region21
    $region20: #{tpu_custom_call.1} parent=1 // pred_region
      %617 = dma.done [#allocation3], 16
    $region21: #{tpu_custom_call.1} parent=1 // pred_fallthru
      _
    %618 = vsyncpa [#allocation3], 1

// kernel: tpu_custom_call.1
$region0: #{tpu_custom_call.1}
  #allocation0 [shape = 'u32[]', space=smem, size = 0x4, offset = 0x4, fixed_abs, tag = 'smem constant byte address 0x4 - core index']
  #allocation1 [shape = 'u32[72,128]{1,0:T(1,128)}', space=vmem, size = 0x9000, scoped, tag = 'internal scratch']
  %s0 = inlined_call_operand.vmem [shape: s32[128,1], index: 0, kind: input, shape index: {}]
  %s1 = inlined_call_operand.vmem [shape: s32[128,1], index: 1, kind: input, shape index: {}]
  %s2 = inlined_call_operand.vmem [shape: f32[64,128], index: 2, kind: input, shape index: {}]
  %s3 = inlined_call_operand.hbm [shape: f32[1,128], index: 3, kind: output, shape index: {}]
  %s4 = sld [smem:[#allocation0]]
  $region22: #{tpu_custom_call.1} parent=0
    _
  %s6 = ssub.s32 1, %s4
  %s7 = scalar_select 0, %s6, %s4
  $region1: #{tpu_custom_call.1} parent=0
    #allocation2 [shape = 'u8[512]{0}', space=vmem, size = 0x400, scoped, tag = 'output window, operand 0, single buffered']
    #allocation3 [shape = 's32[1]{0}', space=sflag, size = 0x4, scoped, tag = 'scoped memory for tpu_custom_call.1']
    %8 = vsyncpa [#allocation3], 0
    // Predicated region
    $region2: #{tpu_custom_call.1} parent=1 // pred_check
      _
    $region3: #{tpu_custom_call.1} parent=1 // pred_check_branch
      %10 = sbr.rel (0) target = $region5
    $region4: #{tpu_custom_call.1} parent=1 // pred_region
      _
    $region5: #{tpu_custom_call.1} parent=1 // pred_fallthru
      _
    // Predicated region
    $region6: #{tpu_custom_call.1} parent=1 // pred_check
      _
    $region7: #{tpu_custom_call.1} parent=1 // pred_check_branch
      %12 = sbr.rel (0) target = $region9
    $region8: #{tpu_custom_call.1} parent=1 // pred_region
      _
    $region9: #{tpu_custom_call.1} parent=1 // pred_fallthru
      _
    // Predicated region
    $region10: #{tpu_custom_call.1} parent=1 // pred_check
      _
    $region11: #{tpu_custom_call.1} parent=1 // pred_check_branch
      %14 = sbr.rel (0) target = $region13
    $region12: #{tpu_custom_call.1} parent=1 // pred_region
      _
    $region13: #{tpu_custom_call.1} parent=1 // pred_fallthru
      _
    %v15 = vlaneseq
    %v16 = vand.u32 %v15, 127
    %v17 = vld [vmem:[%s0] sm:$0xff]
    %v18 = vld [vmem:[%s0 + $0x8] sm:$0xff]
    %v19 = vld [vmem:[%s0 + $0x10] sm:$0xff]
    %v20 = vld [vmem:[%s0 + $0x18] sm:$0xff]
    %v21 = vld [vmem:[%s0 + $0x20] sm:$0xff]
    %v22 = vld [vmem:[%s0 + $0x28] sm:$0xff]
    %v23 = vld [vmem:[%s0 + $0x30] sm:$0xff]
    %v24 = vld [vmem:[%s0 + $0x38] sm:$0xff]
    %v25 = vld [vmem:[%s0 + $0x40] sm:$0xff]
    %v26 = vld [vmem:[%s0 + $0x48] sm:$0xff]
    %v27 = vld [vmem:[%s0 + $0x50] sm:$0xff]
    %v28 = vld [vmem:[%s0 + $0x58] sm:$0xff]
    %v29 = vld [vmem:[%s0 + $0x60] sm:$0xff]
    %v30 = vld [vmem:[%s0 + $0x68] sm:$0xff]
    %v31 = vld [vmem:[%s0 + $0x70] sm:$0xff]
    %v32 = vld [vmem:[%s0 + $0x78] sm:$0xff]
    %33 = vset.pattern.permute.xlu0 0
    %34 = vperm.xlu0 %33, %v17
    %v35 = vpop.permute.xlu0 %34
    %36 = vset.pattern.permute.xlu0 0
    %37 = vperm.xlu0 %36, %v18
    %v38 = vpop.permute.xlu0 %37
    %39 = vset.pattern.permute.xlu0 0
    %40 = vperm.xlu0 %39, %v19
    %v41 = vpop.permute.xlu0 %40
    %42 = vset.pattern.permute.xlu0 0
    %43 = vperm.xlu0 %42, %v20
    %v44 = vpop.permute.xlu0 %43
    %45 = vset.pattern.permute.xlu0 0
    %46 = vperm.xlu0 %45, %v21
    %v47 = vpop.permute.xlu0 %46
    %48 = vset.pattern.permute.xlu0 0
    %49 = vperm.xlu0 %48, %v22
    %v50 = vpop.permute.xlu0 %49
    %51 = vset.pattern.permute.xlu0 0
    %52 = vperm.xlu0 %51, %v23
    %v53 = vpop.permute.xlu0 %52
    %54 = vset.pattern.permute.xlu0 0
    %55 = vperm.xlu0 %54, %v24
    %v56 = vpop.permute.xlu0 %55
    %57 = vset.pattern.permute.xlu0 0
    %58 = vperm.xlu0 %57, %v25
    %v59 = vpop.permute.xlu0 %58
    %60 = vset.pattern.permute.xlu0 0
    %61 = vperm.xlu0 %60, %v26
    %v62 = vpop.permute.xlu0 %61
    %63 = vset.pattern.permute.xlu0 0
    %64 = vperm.xlu0 %63, %v27
    %v65 = vpop.permute.xlu0 %64
    %66 = vset.pattern.permute.xlu0 0
    %67 = vperm.xlu0 %66, %v28
    %v68 = vpop.permute.xlu0 %67
    %69 = vset.pattern.permute.xlu0 0
    %70 = vperm.xlu0 %69, %v29
    %v71 = vpop.permute.xlu0 %70
    %72 = vset.pattern.permute.xlu0 0
    %73 = vperm.xlu0 %72, %v30
    %v74 = vpop.permute.xlu0 %73
    %75 = vset.pattern.permute.xlu0 0
    %76 = vperm.xlu0 %75, %v31
    %v77 = vpop.permute.xlu0 %76
    %78 = vset.pattern.permute.xlu0 0
    %79 = vperm.xlu0 %78, %v32
    %v80 = vpop.permute.xlu0 %79
    %vm81 = vcmp.eq.s32.totalorder %v16, %v35
    %vm82 = vcmp.eq.s32.totalorder %v16, %v38
    %vm83 = vcmp.eq.s32.totalorder %v16, %v41
    %vm84 = vcmp.eq.s32.totalorder %v16, %v44
    %vm85 = vcmp.eq.s32.totalorder %v16, %v47
    %vm86 = vcmp.eq.s32.totalorder %v16, %v50
    %vm87 = vcmp.eq.s32.totalorder %v16, %v53
    %vm88 = vcmp.eq.s32.totalorder %v16, %v56
    %vm89 = vcmp.eq.s32.totalorder %v16, %v59
    %vm90 = vcmp.eq.s32.totalorder %v16, %v62
    %vm91 = vcmp.eq.s32.totalorder %v16, %v65
    %vm92 = vcmp.eq.s32.totalorder %v16, %v68
    %vm93 = vcmp.eq.s32.totalorder %v16, %v71
    %vm94 = vcmp.eq.s32.totalorder %v16, %v74
    %vm95 = vcmp.eq.s32.totalorder %v16, %v77
    %vm96 = vcmp.eq.s32.totalorder %v16, %v80
    %v97 = vsel %vm81, 1, 0
    %v98 = vsel %vm82, 1, 0
    %v99 = vsel %vm83, 1, 0
    %v100 = vsel %vm84, 1, 0
    %v101 = vsel %vm85, 1, 0
    %v102 = vsel %vm86, 1, 0
    %v103 = vsel %vm87, 1, 0
    %v104 = vsel %vm88, 1, 0
    %v105 = vsel %vm89, 1, 0
    %v106 = vsel %vm90, 1, 0
    %v107 = vsel %vm91, 1, 0
    %v108 = vsel %vm92, 1, 0
    %v109 = vsel %vm93, 1, 0
    %v110 = vsel %vm94, 1, 0
    %v111 = vsel %vm95, 1, 0
    %v112 = vsel %vm96, 1, 0
    %v113 = vcvt.s32.f32 %v97
    %v114 = vcvt.s32.f32 %v98
    %v115 = vcvt.s32.f32 %v99
    %v116 = vcvt.s32.f32 %v100
    %v117 = vcvt.s32.f32 %v101
    %v118 = vcvt.s32.f32 %v102
    %v119 = vcvt.s32.f32 %v103
    %v120 = vcvt.s32.f32 %v104
    %v121 = vcvt.s32.f32 %v105
    %v122 = vcvt.s32.f32 %v106
    %v123 = vcvt.s32.f32 %v107
    %v124 = vcvt.s32.f32 %v108
    %v125 = vcvt.s32.f32 %v109
    %v126 = vcvt.s32.f32 %v110
    %v127 = vcvt.s32.f32 %v111
    %v128 = vcvt.s32.f32 %v112
    %v129 = vld [vmem:[%s1] sm:$0xff]
    %v130 = vld [vmem:[%s1 + $0x8] sm:$0xff]
    %v131 = vld [vmem:[%s1 + $0x10] sm:$0xff]
    %v132 = vld [vmem:[%s1 + $0x18] sm:$0xff]
    %v133 = vld [vmem:[%s1 + $0x20] sm:$0xff]
    %v134 = vld [vmem:[%s1 + $0x28] sm:$0xff]
    %v135 = vld [vmem:[%s1 + $0x30] sm:$0xff]
    %v136 = vld [vmem:[%s1 + $0x38] sm:$0xff]
    %v137 = vld [vmem:[%s1 + $0x40] sm:$0xff]
    %v138 = vld [vmem:[%s1 + $0x48] sm:$0xff]
    %v139 = vld [vmem:[%s1 + $0x50] sm:$0xff]
    %v140 = vld [vmem:[%s1 + $0x58] sm:$0xff]
    %v141 = vld [vmem:[%s1 + $0x60] sm:$0xff]
    %v142 = vld [vmem:[%s1 + $0x68] sm:$0xff]
    %v143 = vld [vmem:[%s1 + $0x70] sm:$0xff]
    %v144 = vld [vmem:[%s1 + $0x78] sm:$0xff]
    %145 = vset.pattern.permute.xlu0 0
    %146 = vperm.xlu0 %145, %v129
    %v147 = vpop.permute.xlu0 %146
    %148 = vset.pattern.permute.xlu0 0
    %149 = vperm.xlu0 %148, %v130
    %v150 = vpop.permute.xlu0 %149
    %151 = vset.pattern.permute.xlu0 0
    %152 = vperm.xlu0 %151, %v131
    %v153 = vpop.permute.xlu0 %152
    %154 = vset.pattern.permute.xlu0 0
    %155 = vperm.xlu0 %154, %v132
    %v156 = vpop.permute.xlu0 %155
    %157 = vset.pattern.permute.xlu0 0
    %158 = vperm.xlu0 %157, %v133
    %v159 = vpop.permute.xlu0 %158
    %160 = vset.pattern.permute.xlu0 0
    %161 = vperm.xlu0 %160, %v134
    %v162 = vpop.permute.xlu0 %161
    %163 = vset.pattern.permute.xlu0 0
    %164 = vperm.xlu0 %163, %v135
    %v165 = vpop.permute.xlu0 %164
    %166 = vset.pattern.permute.xlu0 0
    %167 = vperm.xlu0 %166, %v136
    %v168 = vpop.permute.xlu0 %167
    %169 = vset.pattern.permute.xlu0 0
    %170 = vperm.xlu0 %169, %v137
    %v171 = vpop.permute.xlu0 %170
    %172 = vset.pattern.permute.xlu0 0
    %173 = vperm.xlu0 %172, %v138
    %v174 = vpop.permute.xlu0 %173
    %175 = vset.pattern.permute.xlu0 0
    %176 = vperm.xlu0 %175, %v139
    %v177 = vpop.permute.xlu0 %176
    %178 = vset.pattern.permute.xlu0 0
    %179 = vperm.xlu0 %178, %v140
    %v180 = vpop.permute.xlu0 %179
    %181 = vset.pattern.permute.xlu0 0
    %182 = vperm.xlu0 %181, %v141
    %v183 = vpop.permute.xlu0 %182
    %184 = vset.pattern.permute.xlu0 0
    %185 = vperm.xlu0 %184, %v142
    %v186 = vpop.permute.xlu0 %185
    %187 = vset.pattern.permute.xlu0 0
    %188 = vperm.xlu0 %187, %v143
    %v189 = vpop.permute.xlu0 %188
    %190 = vset.pattern.permute.xlu0 0
    %191 = vperm.xlu0 %190, %v144
    %v192 = vpop.permute.xlu0 %191
    %vm193 = vcmp.eq.s32.totalorder %v16, %v147
    %vm194 = vcmp.eq.s32.totalorder %v16, %v150
    %vm195 = vcmp.eq.s32.totalorder %v16, %v153
    %vm196 = vcmp.eq.s32.totalorder %v16, %v156
    %vm197 = vcmp.eq.s32.totalorder %v16, %v159
    %vm198 = vcmp.eq.s32.totalorder %v16, %v162
    %vm199 = vcmp.eq.s32.totalorder %v16, %v165
    %vm200 = vcmp.eq.s32.totalorder %v16, %v168
    %vm201 = vcmp.eq.s32.totalorder %v16, %v171
    %vm202 = vcmp.eq.s32.totalorder %v16, %v174
    %vm203 = vcmp.eq.s32.totalorder %v16, %v177
    %vm204 = vcmp.eq.s32.totalorder %v16, %v180
    %vm205 = vcmp.eq.s32.totalorder %v16, %v183
    %vm206 = vcmp.eq.s32.totalorder %v16, %v186
    %vm207 = vcmp.eq.s32.totalorder %v16, %v189
    %vm208 = vcmp.eq.s32.totalorder %v16, %v192
    %v209 = vsel %vm193, 1, 0
    %v210 = vsel %vm194, 1, 0
    %v211 = vsel %vm195, 1, 0
    %v212 = vsel %vm196, 1, 0
    %v213 = vsel %vm197, 1, 0
    %v214 = vsel %vm198, 1, 0
    %v215 = vsel %vm199, 1, 0
    %v216 = vsel %vm200, 1, 0
    %v217 = vsel %vm201, 1, 0
    %v218 = vsel %vm202, 1, 0
    %v219 = vsel %vm203, 1, 0
    %v220 = vsel %vm204, 1, 0
    %v221 = vsel %vm205, 1, 0
    %v222 = vsel %vm206, 1, 0
    %v223 = vsel %vm207, 1, 0
    %v224 = vsel %vm208, 1, 0
    %v225 = vcvt.s32.f32 %v209
    %v226 = vcvt.s32.f32 %v210
    %v227 = vcvt.s32.f32 %v211
    %v228 = vcvt.s32.f32 %v212
    %v229 = vcvt.s32.f32 %v213
    %v230 = vcvt.s32.f32 %v214
    %v231 = vcvt.s32.f32 %v215
    %v232 = vcvt.s32.f32 %v216
    %v233 = vcvt.s32.f32 %v217
    %v234 = vcvt.s32.f32 %v218
    %v235 = vcvt.s32.f32 %v219
    %v236 = vcvt.s32.f32 %v220
    %v237 = vcvt.s32.f32 %v221
    %v238 = vcvt.s32.f32 %v222
    %v239 = vcvt.s32.f32 %v223
    %v240 = vcvt.s32.f32 %v224
    %v241 = vld [vmem:[%s2] sm:$0xff]
    %v242 = vld [vmem:[%s2 + $0x8] sm:$0xff]
    %v243 = vld [vmem:[%s2 + $0x10] sm:$0xff]
    %v244 = vld [vmem:[%s2 + $0x18] sm:$0xff]
    %v245 = vld [vmem:[%s2 + $0x20] sm:$0xff]
    %v246 = vld [vmem:[%s2 + $0x28] sm:$0xff]
    %v247 = vld [vmem:[%s2 + $0x30] sm:$0xff]
    %v248 = vld [vmem:[%s2 + $0x38] sm:$0xff]
    %vm249 = vcmask 523264
    %v251 = vsel %vm249, %v113, 0
    %v254 = vsel %vm249, %v114, 0
    %v257 = vsel %vm249, %v115, 0
    %v260 = vsel %vm249, %v116, 0
    %v263 = vsel %vm249, %v117, 0
    %v266 = vsel %vm249, %v118, 0
    %v269 = vsel %vm249, %v119, 0
    %v272 = vsel %vm249, %v120, 0
    %v275 = vsel %vm249, %v121, 0
    %v278 = vsel %vm249, %v122, 0
    %v281 = vsel %vm249, %v123, 0
    %v284 = vsel %vm249, %v124, 0
    %v287 = vsel %vm249, %v125, 0
    %v290 = vsel %vm249, %v126, 0
    %v293 = vsel %vm249, %v127, 0
    %v296 = vsel %vm249, %v128, 0
    %298 = vmatpush.msra.mxu0 0.0
    %299 = vmatpush.msra.mxu0 0.0
    %300 = vmatpush.msra.mxu0 0.0
    %301 = vmatpush.msra.mxu0 0.0
    %302 = vmatpush.msra.mxu0 0.0
    %303 = vmatpush.msra.mxu0 0.0
    %304 = vmatpush.msra.mxu0 0.0
    %305 = vmatpush.msra.mxu0 0.0
    %306 = vmatpush.msra.mxu0 %v248
    %307 = vmatpush.msra.mxu0 %v247
    %308 = vmatpush.msra.mxu0 %v246
    %309 = vmatpush.msra.mxu0 %v245
    %310 = vmatpush.msra.mxu0 %v244
    %311 = vmatpush.msra.mxu0 %v243
    %312 = vmatpush.msra.mxu0 %v242
    %313 = vmatpush.msra.mxu0 %v241
    %314 = vmatmul.f32.gmra.mxu0 %v251
    %v315 = vpop.f32.mrf.mxu0
    %v316 = vadd.f32 0.0, %v315
    %317 = vmatmul.f32.gmra.mxu0 %v254
    %v318 = vpop.f32.mrf.mxu0
    %v319 = vadd.f32 0.0, %v318
    %320 = vmatmul.f32.gmra.mxu0 %v257
    %v321 = vpop.f32.mrf.mxu0
    %v322 = vadd.f32 0.0, %v321
    %323 = vmatmul.f32.gmra.mxu0 %v260
    %v324 = vpop.f32.mrf.mxu0
    %v325 = vadd.f32 0.0, %v324
    %326 = vmatmul.f32.gmra.mxu0 %v263
    %v327 = vpop.f32.mrf.mxu0
    %v328 = vadd.f32 0.0, %v327
    %329 = vmatmul.f32.gmra.mxu0 %v266
    %v330 = vpop.f32.mrf.mxu0
    %v331 = vadd.f32 0.0, %v330
    %332 = vmatmul.f32.gmra.mxu0 %v269
    %v333 = vpop.f32.mrf.mxu0
    %v334 = vadd.f32 0.0, %v333
    %335 = vmatmul.f32.gmra.mxu0 %v272
    %v336 = vpop.f32.mrf.mxu0
    %v337 = vadd.f32 0.0, %v336
    %338 = vmatmul.f32.gmra.mxu0 %v275
    %v339 = vpop.f32.mrf.mxu0
    %v340 = vadd.f32 0.0, %v339
    %341 = vmatmul.f32.gmra.mxu0 %v278
    %v342 = vpop.f32.mrf.mxu0
    %v343 = vadd.f32 0.0, %v342
    %344 = vmatmul.f32.gmra.mxu0 %v281
    %v345 = vpop.f32.mrf.mxu0
    %v346 = vadd.f32 0.0, %v345
    %347 = vmatmul.f32.gmra.mxu0 %v284
    %v348 = vpop.f32.mrf.mxu0
    %v349 = vadd.f32 0.0, %v348
    %350 = vmatmul.f32.gmra.mxu0 %v287
    %v351 = vpop.f32.mrf.mxu0
    %v352 = vadd.f32 0.0, %v351
    %353 = vmatmul.f32.gmra.mxu0 %v290
    %v354 = vpop.f32.mrf.mxu0
    %v355 = vadd.f32 0.0, %v354
    %356 = vmatmul.f32.gmra.mxu0 %v293
    %v357 = vpop.f32.mrf.mxu0
    %v358 = vadd.f32 0.0, %v357
    %359 = vmatmul.f32.gmra.mxu0 %v296
    %v360 = vpop.f32.mrf.mxu0
    %v361 = vadd.f32 0.0, %v360
    %362 = vdwg.mxu0
    %v364 = vsel %vm249, %v225, 0
    %v367 = vsel %vm249, %v226, 0
    %v370 = vsel %vm249, %v227, 0
    %v373 = vsel %vm249, %v228, 0
    %v376 = vsel %vm249, %v229, 0
    %v379 = vsel %vm249, %v230, 0
    %v382 = vsel %vm249, %v231, 0
    %v385 = vsel %vm249, %v232, 0
    %v388 = vsel %vm249, %v233, 0
    %v391 = vsel %vm249, %v234, 0
    %v394 = vsel %vm249, %v235, 0
    %v397 = vsel %vm249, %v236, 0
    %v400 = vsel %vm249, %v237, 0
    %v403 = vsel %vm249, %v238, 0
    %v406 = vsel %vm249, %v239, 0
    %v409 = vsel %vm249, %v240, 0
    %411 = vmatpush.msra.mxu0 0.0
    %412 = vmatpush.msra.mxu0 0.0
    %413 = vmatpush.msra.mxu0 0.0
    %414 = vmatpush.msra.mxu0 0.0
    %415 = vmatpush.msra.mxu0 0.0
    %416 = vmatpush.msra.mxu0 0.0
    %417 = vmatpush.msra.mxu0 0.0
    %418 = vmatpush.msra.mxu0 0.0
    %419 = vmatpush.msra.mxu0 %v248
    %420 = vmatpush.msra.mxu0 %v247
    %421 = vmatpush.msra.mxu0 %v246
    %422 = vmatpush.msra.mxu0 %v245
    %423 = vmatpush.msra.mxu0 %v244
    %424 = vmatpush.msra.mxu0 %v243
    %425 = vmatpush.msra.mxu0 %v242
    %426 = vmatpush.msra.mxu0 %v241
    %427 = vmatmul.f32.gmra.mxu0 %v364
    %v428 = vpop.f32.mrf.mxu0
    %v429 = vadd.f32 0.0, %v428
    %430 = vmatmul.f32.gmra.mxu0 %v367
    %v431 = vpop.f32.mrf.mxu0
    %v432 = vadd.f32 0.0, %v431
    %433 = vmatmul.f32.gmra.mxu0 %v370
    %v434 = vpop.f32.mrf.mxu0
    %v435 = vadd.f32 0.0, %v434
    %436 = vmatmul.f32.gmra.mxu0 %v373
    %v437 = vpop.f32.mrf.mxu0
    %v438 = vadd.f32 0.0, %v437
    %439 = vmatmul.f32.gmra.mxu0 %v376
    %v440 = vpop.f32.mrf.mxu0
    %v441 = vadd.f32 0.0, %v440
    %442 = vmatmul.f32.gmra.mxu0 %v379
    %v443 = vpop.f32.mrf.mxu0
    %v444 = vadd.f32 0.0, %v443
    %445 = vmatmul.f32.gmra.mxu0 %v382
    %v446 = vpop.f32.mrf.mxu0
    %v447 = vadd.f32 0.0, %v446
    %448 = vmatmul.f32.gmra.mxu0 %v385
    %v449 = vpop.f32.mrf.mxu0
    %v450 = vadd.f32 0.0, %v449
    %451 = vmatmul.f32.gmra.mxu0 %v388
    %v452 = vpop.f32.mrf.mxu0
    %v453 = vadd.f32 0.0, %v452
    %454 = vmatmul.f32.gmra.mxu0 %v391
    %v455 = vpop.f32.mrf.mxu0
    %v456 = vadd.f32 0.0, %v455
    %457 = vmatmul.f32.gmra.mxu0 %v394
    %v458 = vpop.f32.mrf.mxu0
    %v459 = vadd.f32 0.0, %v458
    %460 = vmatmul.f32.gmra.mxu0 %v397
    %v461 = vpop.f32.mrf.mxu0
    %v462 = vadd.f32 0.0, %v461
    %463 = vmatmul.f32.gmra.mxu0 %v400
    %v464 = vpop.f32.mrf.mxu0
    %v465 = vadd.f32 0.0, %v464
    %466 = vmatmul.f32.gmra.mxu0 %v403
    %v467 = vpop.f32.mrf.mxu0
    %v468 = vadd.f32 0.0, %v467
    %469 = vmatmul.f32.gmra.mxu0 %v406
    %v470 = vpop.f32.mrf.mxu0
    %v471 = vadd.f32 0.0, %v470
    %472 = vmatmul.f32.gmra.mxu0 %v409
    %v473 = vpop.f32.mrf.mxu0
    %v474 = vadd.f32 0.0, %v473
    %475 = vdwg.mxu0
    %v476 = vmul.f32 %v316, %v429
    %v477 = vmul.f32 %v319, %v432
    %v478 = vmul.f32 %v322, %v435
    %v479 = vmul.f32 %v325, %v438
    %v480 = vmul.f32 %v328, %v441
    %v481 = vmul.f32 %v331, %v444
    %v482 = vmul.f32 %v334, %v447
    %v483 = vmul.f32 %v337, %v450
    %v484 = vmul.f32 %v340, %v453
    %v485 = vmul.f32 %v343, %v456
    %v486 = vmul.f32 %v346, %v459
    %v487 = vmul.f32 %v349, %v462
    %v488 = vmul.f32 %v352, %v465
    %v489 = vmul.f32 %v355, %v468
    %v490 = vmul.f32 %v358, %v471
    %v491 = vmul.f32 %v361, %v474
    %492 = vadd.xlane.f32.xlu0 %v476
    %v493 = vpop.xlane.xlu0 %492
    %494 = vadd.xlane.f32.xlu0 %v477
    %v495 = vpop.xlane.xlu0 %494
    %496 = vadd.xlane.f32.xlu0 %v478
    %v497 = vpop.xlane.xlu0 %496
    %498 = vadd.xlane.f32.xlu0 %v479
    %v499 = vpop.xlane.xlu0 %498
    %500 = vadd.xlane.f32.xlu0 %v480
    %v501 = vpop.xlane.xlu0 %500
    %502 = vadd.xlane.f32.xlu0 %v481
    %v503 = vpop.xlane.xlu0 %502
    %504 = vadd.xlane.f32.xlu0 %v482
    %v505 = vpop.xlane.xlu0 %504
    %506 = vadd.xlane.f32.xlu0 %v483
    %v507 = vpop.xlane.xlu0 %506
    %508 = vadd.xlane.f32.xlu0 %v484
    %v509 = vpop.xlane.xlu0 %508
    %510 = vadd.xlane.f32.xlu0 %v485
    %v511 = vpop.xlane.xlu0 %510
    %512 = vadd.xlane.f32.xlu0 %v486
    %v513 = vpop.xlane.xlu0 %512
    %514 = vadd.xlane.f32.xlu0 %v487
    %v515 = vpop.xlane.xlu0 %514
    %516 = vadd.xlane.f32.xlu0 %v488
    %v517 = vpop.xlane.xlu0 %516
    %518 = vadd.xlane.f32.xlu0 %v489
    %v519 = vpop.xlane.xlu0 %518
    %520 = vadd.xlane.f32.xlu0 %v490
    %v521 = vpop.xlane.xlu0 %520
    %522 = vadd.xlane.f32.xlu0 %v491
    %v523 = vpop.xlane.xlu0 %522
    %v540 = vperm.slane %v493, %v16
    %v541 = vadd.s32 %v16, 4294967288
    %v542 = vperm.slane %v495, %v541
    %vm543 = vcmask 130112
    %v544 = vsel %vm543, %v542, %v540
    %v545 = vadd.s32 %v16, 4294967280
    %v546 = vperm.slane %v497, %v545
    %vm547 = vcmask 195712
    %v548 = vsel %vm547, %v546, %v544
    %v549 = vadd.s32 %v16, 4294967272
    %v550 = vperm.slane %v499, %v549
    %vm551 = vcmask 261312
    %v552 = vsel %vm551, %v550, %v548
    %v553 = vadd.s32 %v16, 4294967264
    %v554 = vperm.slane %v501, %v553
    %vm555 = vcmask 326912
    %v556 = vsel %vm555, %v554, %v552
    %v557 = vadd.s32 %v16, 4294967256
    %v558 = vperm.slane %v503, %v557
    %vm559 = vcmask 392512
    %v560 = vsel %vm559, %v558, %v556
    %v561 = vadd.s32 %v16, 4294967248
    %v562 = vperm.slane %v505, %v561
    %vm563 = vcmask 458112
    %v564 = vsel %vm563, %v562, %v560
    %v565 = vadd.s32 %v16, 4294967240
    %v566 = vperm.slane %v507, %v565
    %vm567 = vcmask 523712
    %v568 = vsel %vm567, %v566, %v564
    %v569 = vadd.s32 %v16, 4294967232
    %v570 = vperm.slane %v509, %v569
    %vm571 = vcmask 589312
    %v572 = vsel %vm571, %v570, %v568
    %v573 = vadd.s32 %v16, 4294967224
    %v574 = vperm.slane %v511, %v573
    %vm575 = vcmask 654912
    %v576 = vsel %vm575, %v574, %v572
    %v577 = vadd.s32 %v16, 4294967216
    %v578 = vperm.slane %v513, %v577
    %vm579 = vcmask 720512
    %v580 = vsel %vm579, %v578, %v576
    %v581 = vadd.s32 %v16, 4294967208
    %v582 = vperm.slane %v515, %v581
    %vm583 = vcmask 786112
    %v584 = vsel %vm583, %v582, %v580
    %v585 = vadd.s32 %v16, 4294967200
    %v586 = vperm.slane %v517, %v585
    %vm587 = vcmask 851712
    %v588 = vsel %vm587, %v586, %v584
    %v589 = vadd.s32 %v16, 4294967192
    %v590 = vperm.slane %v519, %v589
    %vm591 = vcmask 917312
    %v592 = vsel %vm591, %v590, %v588
    %v593 = vadd.s32 %v16, 4294967184
    %v594 = vperm.slane %v521, %v593
    %vm595 = vcmask 982912
    %v596 = vsel %vm595, %v594, %v592
    %v597 = vadd.s32 %v16, 4294967176
    %v598 = vperm.slane %v523, %v597
    %vm599 = vcmask 1048512
    %v600 = vsel %vm599, %v598, %v596
    %602 = vst [vmem:[#allocation2] sm:$0x1] %v600
    // Predicated region
    $region14: #{tpu_custom_call.1} parent=1 // pred_check
      _
    $region15: #{tpu_custom_call.1} parent=1 // pred_check_branch
      %604 = sbr.rel (0) target = $region17
    $region16: #{tpu_custom_call.1} parent=1 // pred_region
      %606 = vsyncadd [#allocation3], 0
      %s608 = sshll.u32 [#allocation2], 4
      %s609 = int_to_ptr.vmem [resolvable:$true] %s608
      %s610 = sshll.u32 %s3, 4
      %s611 = int_to_ptr.hbm [resolvable:$true] %s610
      %613 = dma.vmem_to_hbm [thread:$0]  %s609, 16, %s611, [#allocation3]
    $region17: #{tpu_custom_call.1} parent=1 // pred_fallthru
      _
    // Predicated region
    $region18: #{tpu_custom_call.1} parent=1 // pred_check
      _
    $region19: #{tpu_custom_call.1} parent=1 // pred_check_branch
      %615 = sbr.rel (0) target = $region21
    $region20: #{tpu_custom_call.1} parent=1 // pred_region
      %617 = dma.done [#allocation3], 16
    $region21: #{tpu_custom_call.1} parent=1 // pred_fallthru
      _
    %618 = vsyncpa [#allocation3], 1

</llo_original>
